<compile_context>
chip_gen: v7x
topology: tpu7x:2x2x1
jax: 0.10.0
libtpu: 0.0.40
codegen_flags: <defaults>
</compile_context>

<pallas_src>
import functools

import jax
import jax.numpy as jnp
import numpy as np
from jax.experimental import pallas as pl
from jax.experimental.pallas import tpu as pltpu


TILE_M = 128  # lane-dense test-point tile


def dilgp_forward_kernel(params_ref, X_ref, Z_ref, Kinv_ref, alpha_ref,
                         mu_ref, var_ref):
    """One grid step handles one (N, TILE_M) slab of test points."""
    amp = params_ref[0]      # amplitude_scale = exp(amplitude_scale_)
    noise = params_ref[1]    # noise_scale     = exp(noise_scale_)
    length = params_ref[2]   # length_scale    = exp(length_scale_)
    scale = params_ref[3]    # self.scale (1.0 at forward time)

    # Hoisted scalar factors (one scalar reciprocal, no per-element divide).
    amp_scale = amp * scale
    neg_half_inv_ls = -0.5 / (length * scale)

    X = X_ref[...]           # (N, D)
    Z = Z_ref[...]           # (TILE_M, D)

    # ---- kernel_mat(X, z): RBF cross-covariance --------------------------
    Xsq = jnp.sum(X * X, axis=1, keepdims=True)                   # (N, 1)
    Zsq = jnp.sum(Z * Z, axis=1, keepdims=True)                   # (TM, 1)
    # NOTE: D is tiny (underfills the MXU contraction) but this op is no
    # longer on the critical path once the triangular solve is removed.
    cross = jnp.dot(X, Z.T, preferred_element_type=jnp.float32)   # (N, TM)
    sqdist = Xsq + Zsq.T - 2.0 * cross                            # (N, TM)
    k = amp_scale * jnp.exp(sqdist * neg_half_inv_ls)             # (N, TM)

    # ---- mu = k.T @ alpha, computed lane-dense as alpha.T @ k -------------
    mu_ref[...] = jnp.dot(alpha_ref[...].T, k,
                          preferred_element_type=jnp.float32)     # (1, TM)

    # ---- var = amp + noise - diag(k.T K^{-1} k) ---------------------------
    # Single dense MXU matmul replaces the old N-step forward substitution.
    w = jnp.dot(Kinv_ref[...], k, preferred_element_type=jnp.float32)  # (N, TM)
    var_ref[...] = (amp + noise
                    - jnp.sum(k * w, axis=0, keepdims=True))      # (1, TM)


@functools.partial(jax.jit, static_argnames=())
def dilgp_forward(params, X_train, x_test, Kinv, alpha):
    N, D = X_train.shape
    M = x_test.shape[0]

    # Pad N to a sublane multiple (8); padded rows of Kinv/alpha are zero so
    # they contribute nothing to mu/var.
    N_pad = ((N + 7) // 8) * 8
    if N_pad != N:
        X_p = jnp.zeros((N_pad, D), jnp.float32).at[:N].set(X_train)
        Kinv_p = jnp.zeros((N_pad, N_pad), jnp.float32).at[:N, :N].set(Kinv)
        alpha_p = jnp.zeros((N_pad, 1), jnp.float32).at[:N].set(alpha)
    else:
        X_p, Kinv_p, alpha_p = X_train, Kinv, alpha

    # Pad M up to a multiple of 128 so every vreg / store is lane-dense.
    M_pad = ((M + TILE_M - 1) // TILE_M) * TILE_M
    Z_p = jnp.zeros((M_pad, D), jnp.float32).at[:M].set(x_test)

    grid = (M_pad // TILE_M,)

    mu_row, var_row = pl.pallas_call(
        dilgp_forward_kernel,
        out_shape=(jax.ShapeDtypeStruct((1, M_pad), jnp.float32),
                   jax.ShapeDtypeStruct((1, M_pad), jnp.float32)),
        grid_spec=pltpu.PrefetchScalarGridSpec(
            num_scalar_prefetch=1,            # params -> SMEM
            grid=grid,
            in_specs=[
                pl.BlockSpec((N_pad, D), lambda j, p: (0, 0)),        # X
                pl.BlockSpec((TILE_M, D), lambda j, p: (j, 0)),       # Z tile
                pl.BlockSpec((N_pad, N_pad), lambda j, p: (0, 0)),    # Kinv
                pl.BlockSpec((N_pad, 1), lambda j, p: (0, 0)),        # alpha
            ],
            out_specs=(
                pl.BlockSpec((1, TILE_M), lambda j, p: (0, j)),       # mu
                pl.BlockSpec((1, TILE_M), lambda j, p: (0, j)),       # var
            ),
        ),
        compiler_params=pltpu.CompilerParams(
            dimension_semantics=("parallel",),
            vmem_limit_bytes=32 * 1024 * 1024,  # safe on v5e's 16 MiB default
        ),
    )(params, X_p, Z_p, Kinv_p, alpha_p)

    mu = mu_row[0, :M].reshape(M, 1)      # torch forward returns (M, 1)
    var = var_row[0, :M]                  # torch forward returns (M,)
    return mu, var


# ------------------------- plain-JAX glue (fit) ------------------------------
def fit_gp_jax(X, y, amp, noise, length):
    """What DILGP.fit() stores for forward(): here L -> (Kinv, alpha)."""
    sq = jnp.sum(X ** 2, axis=1, keepdims=True)
    sqdist = sq + sq.T - 2.0 * (X @ X.T)
    K = amp * jnp.exp(-0.5 * sqdist / length) + noise * jnp.eye(
        X.shape[0], dtype=X.dtype)
    L = jnp.linalg.cholesky(K)
    alpha = jax.scipy.linalg.cho_solve((L, True), y)          # K^{-1} y
    Kinv = jax.scipy.linalg.cho_solve((L, True),
                                      jnp.eye(X.shape[0], dtype=X.dtype))
    return L, Kinv, alpha


def forward_reference(params, X, Z, L, alpha):
    amp, noise, length, scale = [float(p) for p in params]
    Xsq = jnp.sum(X ** 2, axis=1, keepdims=True)
    Zsq = jnp.sum(Z ** 2, axis=1, keepdims=True)
    k = amp * scale * jnp.exp(-0.5 * (Xsq + Zsq.T - 2.0 * X @ Z.T)
                              / (length * scale))
    v = jax.scipy.linalg.solve_triangular(L, k, lower=True)
    mu = k.T @ alpha
    var = amp + noise - jnp.diag(v.T @ v)
    return mu, var


if __name__ == "__main__":
    # Hyperparameters matching __init__ defaults (log(1.0) for all three).
    amplitude = jnp.exp(jnp.float32(np.log(1.0)))
    noise = jnp.exp(jnp.float32(np.log(1.0)))
    length = jnp.exp(jnp.float32(np.log(1.0)))
    scale = jnp.float32(1.0)
    params = jnp.stack([amplitude, noise, length, scale]).astype(jnp.float32)

    # Small deterministic example data.
    N, D, M = 64, 8, 16
    key = jax.random.PRNGKey(0)
    kx, ky, kz = jax.random.split(key, 3)
    X_train = jax.random.normal(kx, (N, D), dtype=jnp.float32)
    y_train = jax.random.normal(ky, (N, 1), dtype=jnp.float32)
    x_test = jax.random.normal(kz, (M, D), dtype=jnp.float32)

    # "fit" glue (what DILGP.fit stores and forward consumes).
    L, Kinv, alpha = fit_gp_jax(X_train, y_train, amplitude, noise, length)

    # Pallas forward.
    mu, var = dilgp_forward(params, X_train, x_test, Kinv, alpha)
    jax.block_until_ready((mu, var))

    # Reference check (uses the triangular solve, like the torch module).
    mu_ref, var_ref = forward_reference(params, X_train, x_test, L, alpha)
    np.testing.assert_allclose(np.asarray(mu), np.asarray(mu_ref),
                               rtol=1e-4, atol=1e-4)
    np.testing.assert_allclose(np.asarray(var), np.asarray(var_ref),
                               rtol=1e-4, atol=1e-4)
    assert mu.shape == (M, 1) and var.shape == (M,)
    print("KERNEL_OK")
</pallas_src>

<mosaic_0001>
module attributes {stable_mosaic.version = 11 : i64} {
  func.func @dilgp_forward_kernel(%arg0: i32, %arg1: memref<4xf32, #tpu.memory_space<smem>>, %arg2: memref<64x8xf32, #tpu.memory_space<vmem>>, %arg3: memref<128x8xf32, #tpu.memory_space<vmem>>, %arg4: memref<64x64xf32, #tpu.memory_space<vmem>>, %arg5: memref<64x1xf32, #tpu.memory_space<vmem>>, %arg6: memref<1x128xf32, #tpu.memory_space<vmem>>, %arg7: memref<1x128xf32, #tpu.memory_space<vmem>>) attributes {dimension_semantics = [#tpu.dimension_semantics<parallel>], iteration_bounds = array<i64: 1>, scalar_prefetch = 1 : i64, scratch_operands = 0 : i64, tpu.core_type = #tpu.core_type<tc>, window_params = [{pipeline_mode = #tpu.pipeline_mode<synchronous>, transform_indices = @transform_0, window_bounds = array<i64: 64, 8>}, {transform_indices = @transform_1, window_bounds = array<i64: 128, 8>}, {pipeline_mode = #tpu.pipeline_mode<synchronous>, transform_indices = @transform_2, window_bounds = array<i64: 64, 64>}, {pipeline_mode = #tpu.pipeline_mode<synchronous>, transform_indices = @transform_3, window_bounds = array<i64: 64, 1>}, {transform_indices = @transform_4, window_bounds = array<i64: 1, 128>}, {transform_indices = @transform_5, window_bounds = array<i64: 1, 128>}]} {
    %c0 = arith.constant 0 : index
    %0 = memref.load %arg1[%c0] : memref<4xf32, #tpu.memory_space<smem>>
    %c1 = arith.constant 1 : index
    %1 = memref.load %arg1[%c1] : memref<4xf32, #tpu.memory_space<smem>>
    %c2 = arith.constant 2 : index
    %2 = memref.load %arg1[%c2] : memref<4xf32, #tpu.memory_space<smem>>
    %c3 = arith.constant 3 : index
    %3 = memref.load %arg1[%c3] : memref<4xf32, #tpu.memory_space<smem>>
    %4 = arith.mulf %0, %3 : f32
    %5 = arith.mulf %2, %3 : f32
    %cst = arith.constant -5.000000e-01 : f32
    %6 = arith.divf %cst, %5 : f32
    %c0_0 = arith.constant 0 : index
    %c0_1 = arith.constant 0 : index
    %7 = vector.load %arg2[%c0_0, %c0_1] : memref<64x8xf32, #tpu.memory_space<vmem>>, vector<64x8xf32>
    %c0_2 = arith.constant 0 : index
    %c0_3 = arith.constant 0 : index
    %8 = vector.load %arg3[%c0_2, %c0_3] : memref<128x8xf32, #tpu.memory_space<vmem>>, vector<128x8xf32>
    %9 = arith.mulf %7, %7 : vector<64x8xf32>
    %cst_4 = arith.constant dense<0.000000e+00> : vector<64xf32>
    %10 = vector.multi_reduction <add>, %9, %cst_4 [1] : vector<64x8xf32> to vector<64xf32>
    %11 = vector.shape_cast %10 : vector<64xf32> to vector<64x1xf32>
    %12 = arith.mulf %8, %8 : vector<128x8xf32>
    %cst_5 = arith.constant dense<0.000000e+00> : vector<128xf32>
    %13 = vector.multi_reduction <add>, %12, %cst_5 [1] : vector<128x8xf32> to vector<128xf32>
    %14 = vector.shape_cast %13 : vector<128xf32> to vector<128x1xf32>
    %15 = tpu.transpose %8, [1, 0] : vector<128x8xf32> -> vector<8x128xf32>
    %cst_6 = arith.constant dense<0.000000e+00> : vector<64x128xf32>
    %16 = tpu.matmul %7, %15, %cst_6 {dimension_numbers = #tpu.dot_dimension_numbers<[1], [0], [0], [1], [0, 0, 1, 1], [], []>} : vector<64x8xf32>, vector<8x128xf32>, vector<64x128xf32> -> vector<64x128xf32>
    %17 = tpu.transpose %14, [1, 0] : vector<128x1xf32> -> vector<1x128xf32>
    %18 = vector.broadcast %11 : vector<64x1xf32> to vector<64x128xf32>
    %19 = vector.broadcast %17 : vector<1x128xf32> to vector<64x128xf32>
    %20 = arith.addf %18, %19 : vector<64x128xf32>
    %cst_7 = arith.constant 2.000000e+00 : f32
    %21 = vector.broadcast %cst_7 : f32 to vector<64x128xf32>
    %22 = arith.mulf %21, %16 : vector<64x128xf32>
    %23 = arith.subf %20, %22 : vector<64x128xf32>
    %24 = vector.broadcast %6 : f32 to vector<64x128xf32>
    %25 = arith.mulf %23, %24 : vector<64x128xf32>
    %26 = math.exp %25 : vector<64x128xf32>
    %27 = vector.broadcast %4 : f32 to vector<64x128xf32>
    %28 = arith.mulf %27, %26 : vector<64x128xf32>
    %c0_8 = arith.constant 0 : index
    %c0_9 = arith.constant 0 : index
    %29 = vector.load %arg5[%c0_8, %c0_9] : memref<64x1xf32, #tpu.memory_space<vmem>>, vector<64x1xf32>
    %30 = tpu.transpose %29, [1, 0] : vector<64x1xf32> -> vector<1x64xf32>
    %cst_10 = arith.constant dense<0.000000e+00> : vector<1x128xf32>
    %31 = tpu.matmul %30, %28, %cst_10 {dimension_numbers = #tpu.dot_dimension_numbers<[1], [0], [0], [1], [0, 0, 1, 1], [], []>} : vector<1x64xf32>, vector<64x128xf32>, vector<1x128xf32> -> vector<1x128xf32>
    %c0_11 = arith.constant 0 : index
    %c0_12 = arith.constant 0 : index
    %32 = vector.load %arg6[%c0_11, %c0_12] : memref<1x128xf32, #tpu.memory_space<vmem>>, vector<1x128xf32>
    tpu.vector_store %arg6[%c0_11, %c0_12], %31 {strides = array<i32>} : memref<1x128xf32, #tpu.memory_space<vmem>>, vector<1x128xf32>,
    %c0_13 = arith.constant 0 : index
    %c0_14 = arith.constant 0 : index
    %33 = vector.load %arg4[%c0_13, %c0_14] : memref<64x64xf32, #tpu.memory_space<vmem>>, vector<64x64xf32>
    %cst_15 = arith.constant dense<0.000000e+00> : vector<64x128xf32>
    %34 = tpu.matmul %33, %28, %cst_15 {dimension_numbers = #tpu.dot_dimension_numbers<[1], [0], [0], [1], [0, 0, 1, 1], [], []>} : vector<64x64xf32>, vector<64x128xf32>, vector<64x128xf32> -> vector<64x128xf32>
    %35 = arith.addf %0, %1 : f32
    %36 = arith.mulf %28, %34 : vector<64x128xf32>
    %cst_16 = arith.constant dense<0.000000e+00> : vector<128xf32>
    %37 = vector.multi_reduction <add>, %36, %cst_16 [0] : vector<64x128xf32> to vector<128xf32>
    %38 = vector.shape_cast %37 : vector<128xf32> to vector<1x128xf32>
    %39 = vector.broadcast %35 : f32 to vector<1x128xf32>
    %40 = arith.subf %39, %38 : vector<1x128xf32>
    %c0_17 = arith.constant 0 : index
    %c0_18 = arith.constant 0 : index
    %41 = vector.load %arg7[%c0_17, %c0_18] : memref<1x128xf32, #tpu.memory_space<vmem>>, vector<1x128xf32>
    tpu.vector_store %arg7[%c0_17, %c0_18], %40 {strides = array<i32>} : memref<1x128xf32, #tpu.memory_space<vmem>>, vector<1x128xf32>,
    return
  }
  func.func @transform_0(%arg0: i32, %arg1: memref<4xf32, #tpu.memory_space<smem>>) -> (i32, i32) {
    %c0_i32 = arith.constant 0 : i32
    %c0_i32_0 = arith.constant 0 : i32
    %c0_i32_1 = arith.constant 0 : i32
    return %c0_i32, %c0_i32_0 : i32, i32
  }
  func.func @transform_1(%arg0: i32, %arg1: memref<4xf32, #tpu.memory_space<smem>>) -> (i32, i32) {
    %c0_i32 = arith.constant 0 : i32
    %c0_i32_0 = arith.constant 0 : i32
    return %arg0, %c0_i32 : i32, i32
  }
  func.func @transform_2(%arg0: i32, %arg1: memref<4xf32, #tpu.memory_space<smem>>) -> (i32, i32) {
    %c0_i32 = arith.constant 0 : i32
    %c0_i32_0 = arith.constant 0 : i32
    %c0_i32_1 = arith.constant 0 : i32
    return %c0_i32, %c0_i32_0 : i32, i32
  }
  func.func @transform_3(%arg0: i32, %arg1: memref<4xf32, #tpu.memory_space<smem>>) -> (i32, i32) {
    %c0_i32 = arith.constant 0 : i32
    %c0_i32_0 = arith.constant 0 : i32
    %c0_i32_1 = arith.constant 0 : i32
    return %c0_i32, %c0_i32_0 : i32, i32
  }
  func.func @transform_4(%arg0: i32, %arg1: memref<4xf32, #tpu.memory_space<smem>>) -> (i32, i32) {
    %c0_i32 = arith.constant 0 : i32
    %c0_i32_0 = arith.constant 0 : i32
    return %c0_i32, %arg0 : i32, i32
  }
  func.func @transform_5(%arg0: i32, %arg1: memref<4xf32, #tpu.memory_space<smem>>) -> (i32, i32) {
    %c0_i32 = arith.constant 0 : i32
    %c0_i32_0 = arith.constant 0 : i32
    return %c0_i32, %arg0 : i32, i32
  }
}

</mosaic_0001>

<llo_original>
// kernel: dilgp_forward.1
$region0: #{dilgp_forward.1}
  #allocation0 [shape = 'u32[]', space=smem, size = 0x4, offset = 0x4, fixed_abs, tag = 'smem constant byte address 0x4 - core index']
  #allocation1 [shape = 'u32[144,128]{1,0:T(1,128)}', space=vmem, size = 0x12000, scoped, tag = 'internal scratch']
  #allocation2 [shape = 's32[1]{0}', space=sflag, size = 0x4, scoped, tag = 'scoped memory for dilgp_forward.1']
  #allocation3 [shape = 'u8[512]{0}', space=smem, size = 0x200, scoped, tag = 'prefetched SMEM operand 0']
  %s0 = inlined_call_operand.vmem [shape: f32[4], index: 0, kind: input, shape index: {}]
  %s1 = inlined_call_operand.vmem [shape: f32[64,8], index: 1, kind: input, shape index: {}]
  %s2 = inlined_call_operand.vmem [shape: f32[128,8], index: 2, kind: input, shape index: {}]
  %s3 = inlined_call_operand.vmem [shape: f32[64,64], index: 3, kind: input, shape index: {}]
  %s4 = inlined_call_operand.vmem [shape: f32[64,1], index: 4, kind: input, shape index: {}]
  %s5 = inlined_call_operand.vmem [shape: f32[1,128], index: 5, kind: output, shape index: {0}]
  %s6 = inlined_call_operand.vmem [shape: f32[1,128], index: 6, kind: output, shape index: {1}]
  %7 = xla_tuple %s5, %s6
  %s8 = sld [smem:[#allocation0]]
  $region34: #{dilgp_forward.1} parent=0
    _
  %s10 = ssub.s32 1, %s8
  %s11 = scalar_select 0, %s10, %s8
  %s12 = sshll.u32 %s0, 4
  %s13 = int_to_ptr.vmem [resolvable:$true] %s12
  %15 = dma.vmem_to_smem %s13, 16, [#allocation3], [#allocation2]
  %16 = dma.done [#allocation2], 16
  %17 = sfence
  // Predicated region
  $region2: #{dilgp_forward.1} parent=0 // pred_check
    _
  $region3: #{dilgp_forward.1} parent=0 // pred_check_branch
    %19 = sbr.rel (0) target = $region5
  $region4: #{dilgp_forward.1} parent=0 // pred_region
    _
  $region5: #{dilgp_forward.1} parent=0 // pred_fallthru
    _
  // Predicated region
  $region6: #{dilgp_forward.1} parent=0 // pred_check
    _
  $region7: #{dilgp_forward.1} parent=0 // pred_check_branch
    %21 = sbr.rel (0) target = $region9
  $region8: #{dilgp_forward.1} parent=0 // pred_region
    _
  $region9: #{dilgp_forward.1} parent=0 // pred_fallthru
    _
  // Predicated region
  $region10: #{dilgp_forward.1} parent=0 // pred_check
    _
  $region11: #{dilgp_forward.1} parent=0 // pred_check_branch
    %23 = sbr.rel (0) target = $region13
  $region12: #{dilgp_forward.1} parent=0 // pred_region
    _
  $region13: #{dilgp_forward.1} parent=0 // pred_fallthru
    _
  // Predicated region
  $region14: #{dilgp_forward.1} parent=0 // pred_check
    _
  $region15: #{dilgp_forward.1} parent=0 // pred_check_branch
    %25 = sbr.rel (0) target = $region17
  $region16: #{dilgp_forward.1} parent=0 // pred_region
    _
  $region17: #{dilgp_forward.1} parent=0 // pred_fallthru
    _
  %s26 = sld [smem:[#allocation3]]
  %s27 = sld [smem:[#allocation3 + $0x1]]
  %s28 = sld [smem:[#allocation3 + $0x2]]
  %s29 = sld [smem:[#allocation3 + $0x3]]
  %s30 = smul.f32 %s26, %s29
  %s31 = smul.f32 %s28, %s29
  %v32 = vstv %s31
  %v33 = vrcp.pop %v32
  %s34 = vtos %v33
  %s35 = smul.f32 -0.5, %s34
  %v36 = vld [vmem:[%s1] sm:$0xff]
  %v37 = vld [vmem:[%s1 + $0x8] sm:$0xff]
  %v38 = vld [vmem:[%s1 + $0x10] sm:$0xff]
  %v39 = vld [vmem:[%s1 + $0x18] sm:$0xff]
  %v40 = vld [vmem:[%s1 + $0x20] sm:$0xff]
  %v41 = vld [vmem:[%s1 + $0x28] sm:$0xff]
  %v42 = vld [vmem:[%s1 + $0x30] sm:$0xff]
  %v43 = vld [vmem:[%s1 + $0x38] sm:$0xff]
  %v44 = vld [vmem:[%s2] sm:$0xff]
  %v45 = vld [vmem:[%s2 + $0x8] sm:$0xff]
  %v46 = vld [vmem:[%s2 + $0x10] sm:$0xff]
  %v47 = vld [vmem:[%s2 + $0x18] sm:$0xff]
  %v48 = vld [vmem:[%s2 + $0x20] sm:$0xff]
  %v49 = vld [vmem:[%s2 + $0x28] sm:$0xff]
  %v50 = vld [vmem:[%s2 + $0x30] sm:$0xff]
  %v51 = vld [vmem:[%s2 + $0x38] sm:$0xff]
  %v52 = vld [vmem:[%s2 + $0x40] sm:$0xff]
  %v53 = vld [vmem:[%s2 + $0x48] sm:$0xff]
  %v54 = vld [vmem:[%s2 + $0x50] sm:$0xff]
  %v55 = vld [vmem:[%s2 + $0x58] sm:$0xff]
  %v56 = vld [vmem:[%s2 + $0x60] sm:$0xff]
  %v57 = vld [vmem:[%s2 + $0x68] sm:$0xff]
  %v58 = vld [vmem:[%s2 + $0x70] sm:$0xff]
  %v59 = vld [vmem:[%s2 + $0x78] sm:$0xff]
  %v60 = vmul.f32 %v36, %v36
  %v61 = vmul.f32 %v37, %v37
  %v62 = vmul.f32 %v38, %v38
  %v63 = vmul.f32 %v39, %v39
  %v64 = vmul.f32 %v40, %v40
  %v65 = vmul.f32 %v41, %v41
  %v66 = vmul.f32 %v42, %v42
  %v67 = vmul.f32 %v43, %v43
  %vm68 = vcmask 64512
  %v69 = vsel %vm68, %v60, 0.0
  %70 = vadd.xlane.f32.xlu0 %v69
  %v71 = vpop.xlane.xlu0 %70
  %v72 = vsel %vm68, %v61, 0.0
  %73 = vadd.xlane.f32.xlu0 %v72
  %v74 = vpop.xlane.xlu0 %73
  %v75 = vsel %vm68, %v62, 0.0
  %76 = vadd.xlane.f32.xlu0 %v75
  %v77 = vpop.xlane.xlu0 %76
  %v78 = vsel %vm68, %v63, 0.0
  %79 = vadd.xlane.f32.xlu0 %v78
  %v80 = vpop.xlane.xlu0 %79
  %v81 = vsel %vm68, %v64, 0.0
  %82 = vadd.xlane.f32.xlu0 %v81
  %v83 = vpop.xlane.xlu0 %82
  %v84 = vsel %vm68, %v65, 0.0
  %85 = vadd.xlane.f32.xlu0 %v84
  %v86 = vpop.xlane.xlu0 %85
  %v87 = vsel %vm68, %v66, 0.0
  %88 = vadd.xlane.f32.xlu0 %v87
  %v89 = vpop.xlane.xlu0 %88
  %v90 = vsel %vm68, %v67, 0.0
  %91 = vadd.xlane.f32.xlu0 %v90
  %v92 = vpop.xlane.xlu0 %91
  %v93 = vmul.f32 %v44, %v44
  %v94 = vmul.f32 %v45, %v45
  %v95 = vmul.f32 %v46, %v46
  %v96 = vmul.f32 %v47, %v47
  %v97 = vmul.f32 %v48, %v48
  %v98 = vmul.f32 %v49, %v49
  %v99 = vmul.f32 %v50, %v50
  %v100 = vmul.f32 %v51, %v51
  %v101 = vmul.f32 %v52, %v52
  %v102 = vmul.f32 %v53, %v53
  %v103 = vmul.f32 %v54, %v54
  %v104 = vmul.f32 %v55, %v55
  %v105 = vmul.f32 %v56, %v56
  %v106 = vmul.f32 %v57, %v57
  %v107 = vmul.f32 %v58, %v58
  %v108 = vmul.f32 %v59, %v59
  %v109 = vsel %vm68, %v93, 0.0
  %110 = vadd.xlane.f32.xlu0 %v109
  %v111 = vpop.xlane.xlu0 %110
  %v112 = vsel %vm68, %v94, 0.0
  %113 = vadd.xlane.f32.xlu0 %v112
  %v114 = vpop.xlane.xlu0 %113
  %v115 = vsel %vm68, %v95, 0.0
  %116 = vadd.xlane.f32.xlu0 %v115
  %v117 = vpop.xlane.xlu0 %116
  %v118 = vsel %vm68, %v96, 0.0
  %119 = vadd.xlane.f32.xlu0 %v118
  %v120 = vpop.xlane.xlu0 %119
  %v121 = vsel %vm68, %v97, 0.0
  %122 = vadd.xlane.f32.xlu0 %v121
  %v123 = vpop.xlane.xlu0 %122
  %v124 = vsel %vm68, %v98, 0.0
  %125 = vadd.xlane.f32.xlu0 %v124
  %v126 = vpop.xlane.xlu0 %125
  %v127 = vsel %vm68, %v99, 0.0
  %128 = vadd.xlane.f32.xlu0 %v127
  %v129 = vpop.xlane.xlu0 %128
  %v130 = vsel %vm68, %v100, 0.0
  %131 = vadd.xlane.f32.xlu0 %v130
  %v132 = vpop.xlane.xlu0 %131
  %v133 = vsel %vm68, %v101, 0.0
  %134 = vadd.xlane.f32.xlu0 %v133
  %v135 = vpop.xlane.xlu0 %134
  %v136 = vsel %vm68, %v102, 0.0
  %137 = vadd.xlane.f32.xlu0 %v136
  %v138 = vpop.xlane.xlu0 %137
  %v139 = vsel %vm68, %v103, 0.0
  %140 = vadd.xlane.f32.xlu0 %v139
  %v141 = vpop.xlane.xlu0 %140
  %v142 = vsel %vm68, %v104, 0.0
  %143 = vadd.xlane.f32.xlu0 %v142
  %v144 = vpop.xlane.xlu0 %143
  %v145 = vsel %vm68, %v105, 0.0
  %146 = vadd.xlane.f32.xlu0 %v145
  %v147 = vpop.xlane.xlu0 %146
  %v148 = vsel %vm68, %v106, 0.0
  %149 = vadd.xlane.f32.xlu0 %v148
  %v150 = vpop.xlane.xlu0 %149
  %v151 = vsel %vm68, %v107, 0.0
  %152 = vadd.xlane.f32.xlu0 %v151
  %v153 = vpop.xlane.xlu0 %152
  %v154 = vsel %vm68, %v108, 0.0
  %155 = vadd.xlane.f32.xlu0 %v154
  %v156 = vpop.xlane.xlu0 %155
  %v158 = vsel %vm68, %v36, 0
  %v161 = vsel %vm68, %v37, 0
  %v164 = vsel %vm68, %v38, 0
  %v167 = vsel %vm68, %v39, 0
  %v170 = vsel %vm68, %v40, 0
  %v173 = vsel %vm68, %v41, 0
  %v176 = vsel %vm68, %v42, 0
  %v179 = vsel %vm68, %v43, 0
  %v182 = vsel %vm68, %v44, 0
  %v185 = vsel %vm68, %v45, 0
  %v188 = vsel %vm68, %v46, 0
  %v191 = vsel %vm68, %v47, 0
  %v194 = vsel %vm68, %v48, 0
  %v197 = vsel %vm68, %v49, 0
  %v200 = vsel %vm68, %v50, 0
  %v203 = vsel %vm68, %v51, 0
  %v206 = vsel %vm68, %v52, 0
  %v209 = vsel %vm68, %v53, 0
  %v212 = vsel %vm68, %v54, 0
  %v215 = vsel %vm68, %v55, 0
  %v218 = vsel %vm68, %v56, 0
  %v221 = vsel %vm68, %v57, 0
  %v224 = vsel %vm68, %v58, 0
  %v227 = vsel %vm68, %v59, 0
  %229 = vmatprep.subr.mxu0 0.0
  %230 = vmatpush1.xpose.msra.mxu0 %v182
  %231 = vmatprep.subr.mxu0 0.0
  %232 = vmatpush1.xpose.msra.mxu0 %v185
  %233 = vmatprep.subr.mxu0 0.0
  %234 = vmatpush1.xpose.msra.mxu0 %v188
  %235 = vmatprep.subr.mxu0 0.0
  %236 = vmatpush1.xpose.msra.mxu0 %v191
  %237 = vmatprep.subr.mxu0 0.0
  %238 = vmatpush1.xpose.msra.mxu0 %v194
  %239 = vmatprep.subr.mxu0 0.0
  %240 = vmatpush1.xpose.msra.mxu0 %v197
  %241 = vmatprep.subr.mxu0 0.0
  %242 = vmatpush1.xpose.msra.mxu0 %v200
  %243 = vmatprep.subr.mxu0 0.0
  %244 = vmatpush1.xpose.msra.mxu0 %v203
  %245 = vmatprep.subr.mxu0 0.0
  %246 = vmatpush1.xpose.msra.mxu0 %v206
  %247 = vmatprep.subr.mxu0 0.0
  %248 = vmatpush1.xpose.msra.mxu0 %v209
  %249 = vmatprep.subr.mxu0 0.0
  %250 = vmatpush1.xpose.msra.mxu0 %v212
  %251 = vmatprep.subr.mxu0 0.0
  %252 = vmatpush1.xpose.msra.mxu0 %v215
  %253 = vmatprep.subr.mxu0 0.0
  %254 = vmatpush1.xpose.msra.mxu0 %v218
  %255 = vmatprep.subr.mxu0 0.0
  %256 = vmatpush1.xpose.msra.mxu0 %v221
  %257 = vmatprep.subr.mxu0 0.0
  %258 = vmatpush1.xpose.msra.mxu0 %v224
  %259 = vmatprep.subr.mxu0 0.0
  %260 = vmatpush1.xpose.msra.mxu0 %v227
  %261 = vmatprep.subr.mxu0 0.0
  %262 = vmatpush1.xpose.msra.mxu0 0.0
  %263 = vmatprep.subr.mxu0 0.0
  %264 = vmatpush1.xpose.msra.mxu0 0.0
  %265 = vmatprep.subr.mxu0 0.0
  %266 = vmatpush1.xpose.msra.mxu0 0.0
  %267 = vmatprep.subr.mxu0 0.0
  %268 = vmatpush1.xpose.msra.mxu0 0.0
  %269 = vmatprep.subr.mxu0 0.0
  %270 = vmatpush1.xpose.msra.mxu0 0.0
  %271 = vmatprep.subr.mxu0 0.0
  %272 = vmatpush1.xpose.msra.mxu0 0.0
  %273 = vmatprep.subr.mxu0 0.0
  %274 = vmatpush1.xpose.msra.mxu0 0.0
  %275 = vmatprep.subr.mxu0 0.0
  %276 = vmatpush1.xpose.msra.mxu0 0.0
  %277 = vmatprep.subr.mxu0 0.0
  %278 = vmatpush1.xpose.msra.mxu0 0.0
  %279 = vmatprep.subr.mxu0 0.0
  %280 = vmatpush1.xpose.msra.mxu0 0.0
  %281 = vmatprep.subr.mxu0 0.0
  %282 = vmatpush1.xpose.msra.mxu0 0.0
  %283 = vmatprep.subr.mxu0 0.0
  %284 = vmatpush1.xpose.msra.mxu0 0.0
  %285 = vmatprep.subr.mxu0 0.0
  %286 = vmatpush1.xpose.msra.mxu0 0.0
  %287 = vmatprep.subr.mxu0 0.0
  %288 = vmatpush1.xpose.msra.mxu0 0.0
  %289 = vmatprep.subr.mxu0 0.0
  %290 = vmatpush1.xpose.msra.mxu0 0.0
  %291 = vmatprep.subr.mxu0 0.0
  %292 = vmatpush1.xpose.msra.mxu0 0.0
  %293 = vmatprep.mubr.f32.mxu0 0.0
  %294 = vmatmul.mubr.f32.gmra.mrb[0].mxu0 %v158
  %v295 = vpop.f32.mrb[0].mxu0
  %v296 = vadd.f32 0.0, %v295
  %v297 = vpop.f32.mrb[0].mxu0
  %298 = vmatprep.mubr.f32.mxu0 0.0
  %299 = vmatmul.mubr.f32.gmra.mrb[0].mxu0 %v161
  %v300 = vpop.f32.mrb[0].mxu0
  %v301 = vadd.f32 0.0, %v300
  %v302 = vpop.f32.mrb[0].mxu0
  %303 = vmatprep.mubr.f32.mxu0 0.0
  %304 = vmatmul.mubr.f32.gmra.mrb[0].mxu0 %v164
  %v305 = vpop.f32.mrb[0].mxu0
  %v306 = vadd.f32 0.0, %v305
  %v307 = vpop.f32.mrb[0].mxu0
  %308 = vmatprep.mubr.f32.mxu0 0.0
  %309 = vmatmul.mubr.f32.gmra.mrb[0].mxu0 %v167
  %v310 = vpop.f32.mrb[0].mxu0
  %v311 = vadd.f32 0.0, %v310
  %v312 = vpop.f32.mrb[0].mxu0
  %313 = vmatprep.mubr.f32.mxu0 0.0
  %314 = vmatmul.mubr.f32.gmra.mrb[0].mxu0 %v170
  %v315 = vpop.f32.mrb[0].mxu0
  %v316 = vadd.f32 0.0, %v315
  %v317 = vpop.f32.mrb[0].mxu0
  %318 = vmatprep.mubr.f32.mxu0 0.0
  %319 = vmatmul.mubr.f32.gmra.mrb[0].mxu0 %v173
  %v320 = vpop.f32.mrb[0].mxu0
  %v321 = vadd.f32 0.0, %v320
  %v322 = vpop.f32.mrb[0].mxu0
  %323 = vmatprep.mubr.f32.mxu0 0.0
  %324 = vmatmul.mubr.f32.gmra.mrb[0].mxu0 %v176
  %v325 = vpop.f32.mrb[0].mxu0
  %v326 = vadd.f32 0.0, %v325
  %v327 = vpop.f32.mrb[0].mxu0
  %328 = vmatprep.mubr.f32.mxu0 0.0
  %329 = vmatmul.mubr.f32.gmra.mrb[0].mxu0 %v179
  %v330 = vpop.f32.mrb[0].mxu0
  %v331 = vadd.f32 0.0, %v330
  %v332 = vpop.f32.mrb[0].mxu0
  %333 = vdwg.mxu0
  %334 = vxpose.xlu0.b32.start [1/16] %v111, 128
  %335 = vxpose.xlu0.b32.cont [2/16] %v114, 128
  %336 = vxpose.xlu0.b32.cont [3/16] %v117, 128
  %337 = vxpose.xlu0.b32.cont [4/16] %v120, 128
  %338 = vxpose.xlu0.b32.cont [5/16] %v123, 128
  %339 = vxpose.xlu0.b32.cont [6/16] %v126, 128
  %340 = vxpose.xlu0.b32.cont [7/16] %v129, 128
  %341 = vxpose.xlu0.b32.cont [8/16] %v132, 128
  %342 = vxpose.xlu0.b32.cont [9/16] %v135, 128
  %343 = vxpose.xlu0.b32.cont [10/16] %v138, 128
  %344 = vxpose.xlu0.b32.cont [11/16] %v141, 128
  %345 = vxpose.xlu0.b32.cont [12/16] %v144, 128
  %346 = vxpose.xlu0.b32.cont [13/16] %v147, 128
  %347 = vxpose.xlu0.b32.cont [14/16] %v150, 128
  %348 = vxpose.xlu0.b32.cont [15/16] %v153, 128
  %349 = vxpose.xlu0.b32.end [16/16] %v156, 128
  %v350 = vpop.trf.xlu0
  %v351 = vpop.trf.xlu0
  %v352 = vpop.trf.xlu0
  %v353 = vpop.trf.xlu0
  %v354 = vpop.trf.xlu0
  %v355 = vpop.trf.xlu0
  %v356 = vpop.trf.xlu0
  %v357 = vpop.trf.xlu0
  %v358 = vpop.trf.xlu0
  %v359 = vpop.trf.xlu0
  %v360 = vpop.trf.xlu0
  %v361 = vpop.trf.xlu0
  %v362 = vpop.trf.xlu0
  %v363 = vpop.trf.xlu0
  %v364 = vpop.trf.xlu0
  %v365 = vpop.trf.xlu0
  %v366 = vlaneseq
  %v367 = vshrl.u32 %v366, 7
  %v368 = vsub.s32 0, %v367
  %v369 = vrot.slane %v350, %v368
  %v370 = vadd.f32 %v71, %v369
  %v371 = vadd.f32 %v74, %v369
  %v372 = vadd.f32 %v77, %v369
  %v373 = vadd.f32 %v80, %v369
  %v374 = vadd.f32 %v83, %v369
  %v375 = vadd.f32 %v86, %v369
  %v376 = vadd.f32 %v89, %v369
  %v377 = vadd.f32 %v92, %v369
  %v378 = vmul.f32 %v296, 2.0
  %v379 = vmul.f32 %v301, 2.0
  %v380 = vmul.f32 %v306, 2.0
  %v381 = vmul.f32 %v311, 2.0
  %v382 = vmul.f32 %v316, 2.0
  %v383 = vmul.f32 %v321, 2.0
  %v384 = vmul.f32 %v326, 2.0
  %v385 = vmul.f32 %v331, 2.0
  %v386 = vsub.f32 %v370, %v378
  %v387 = vsub.f32 %v371, %v379
  %v388 = vsub.f32 %v372, %v380
  %v389 = vsub.f32 %v373, %v381
  %v390 = vsub.f32 %v374, %v382
  %v391 = vsub.f32 %v375, %v383
  %v392 = vsub.f32 %v376, %v384
  %v393 = vsub.f32 %v377, %v385
  %v394 = vstv %s35
  %v395 = vmul.f32 %v386, %v394
  %v396 = vmul.f32 %v387, %v394
  %v397 = vmul.f32 %v388, %v394
  %v398 = vmul.f32 %v389, %v394
  %v399 = vmul.f32 %v390, %v394
  %v400 = vmul.f32 %v391, %v394
  %v401 = vmul.f32 %v392, %v394
  %v402 = vmul.f32 %v393, %v394
  %v403 = vmul.f32 %v395, 1.442695
  %v404 = vpow.pop %v403
  %v405 = vmul.f32 %v396, 1.442695
  %v406 = vpow.pop %v405
  %v407 = vmul.f32 %v397, 1.442695
  %v408 = vpow.pop %v407
  %v409 = vmul.f32 %v398, 1.442695
  %v410 = vpow.pop %v409
  %v411 = vmul.f32 %v399, 1.442695
  %v412 = vpow.pop %v411
  %v413 = vmul.f32 %v400, 1.442695
  %v414 = vpow.pop %v413
  %v415 = vmul.f32 %v401, 1.442695
  %v416 = vpow.pop %v415
  %v417 = vmul.f32 %v402, 1.442695
  %v418 = vpow.pop %v417
  %v419 = vstv %s30
  %v420 = vmul.f32 %v419, %v404
  %v421 = vmul.f32 %v419, %v406
  %v422 = vmul.f32 %v419, %v408
  %v423 = vmul.f32 %v419, %v410
  %v424 = vmul.f32 %v419, %v412
  %v425 = vmul.f32 %v419, %v414
  %v426 = vmul.f32 %v419, %v416
  %v427 = vmul.f32 %v419, %v418
  %v428 = vld [vmem:[%s4] sm:$0xff]
  %v429 = vld [vmem:[%s4 + $0x8] sm:$0xff]
  %v430 = vld [vmem:[%s4 + $0x10] sm:$0xff]
  %v431 = vld [vmem:[%s4 + $0x18] sm:$0xff]
  %v432 = vld [vmem:[%s4 + $0x20] sm:$0xff]
  %v433 = vld [vmem:[%s4 + $0x28] sm:$0xff]
  %v434 = vld [vmem:[%s4 + $0x30] sm:$0xff]
  %v435 = vld [vmem:[%s4 + $0x38] sm:$0xff]
  %436 = vxpose.xlu0.b32.start [1/16] %v428, 128
  %437 = vxpose.xlu0.b32.cont [2/16] %v429, 128
  %438 = vxpose.xlu0.b32.cont [3/16] %v430, 128
  %439 = vxpose.xlu0.b32.cont [4/16] %v431, 128
  %440 = vxpose.xlu0.b32.cont [5/16] %v432, 128
  %441 = vxpose.xlu0.b32.cont [6/16] %v433, 128
  %442 = vxpose.xlu0.b32.cont [7/16] %v434, 128
  %443 = vxpose.xlu0.b32.cont [8/16] %v435, 128
  %444 = vxpose.xlu0.b32.cont [9/16] 0.0, 128
  %445 = vxpose.xlu0.b32.cont [10/16] 0.0, 128
  %446 = vxpose.xlu0.b32.cont [11/16] 0.0, 128
  %447 = vxpose.xlu0.b32.cont [12/16] 0.0, 128
  %448 = vxpose.xlu0.b32.cont [13/16] 0.0, 128
  %449 = vxpose.xlu0.b32.cont [14/16] 0.0, 128
  %450 = vxpose.xlu0.b32.cont [15/16] 0.0, 128
  %451 = vxpose.xlu0.b32.end [16/16] 0.0, 128
  %v452 = vpop.trf.xlu0
  %v453 = vpop.trf.xlu0
  %v454 = vpop.trf.xlu0
  %v455 = vpop.trf.xlu0
  %v456 = vpop.trf.xlu0
  %v457 = vpop.trf.xlu0
  %v458 = vpop.trf.xlu0
  %v459 = vpop.trf.xlu0
  %v460 = vpop.trf.xlu0
  %v461 = vpop.trf.xlu0
  %v462 = vpop.trf.xlu0
  %v463 = vpop.trf.xlu0
  %v464 = vpop.trf.xlu0
  %v465 = vpop.trf.xlu0
  %v466 = vpop.trf.xlu0
  %v467 = vpop.trf.xlu0
  %vm468 = vcmask 523264
  %v470 = vsel %vm468, %v452, 0
  %472 = vmatprep.subr.mxu0 0.0
  %473 = vmatpush1.msra.mxu0 %v420
  %474 = vmatprep.subr.mxu0 0.0
  %475 = vmatpush1.msra.mxu0 %v421
  %476 = vmatprep.subr.mxu0 0.0
  %477 = vmatpush1.msra.mxu0 %v422
  %478 = vmatprep.subr.mxu0 0.0
  %479 = vmatpush1.msra.mxu0 %v423
  %480 = vmatprep.subr.mxu0 0.0
  %481 = vmatpush1.msra.mxu0 %v424
  %482 = vmatprep.subr.mxu0 0.0
  %483 = vmatpush1.msra.mxu0 %v425
  %484 = vmatprep.subr.mxu0 0.0
  %485 = vmatpush1.msra.mxu0 %v426
  %486 = vmatprep.subr.mxu0 0.0
  %487 = vmatpush1.msra.mxu0 %v427
  %488 = vmatprep.subr.mxu0 0.0
  %489 = vmatpush1.msra.mxu0 0.0
  %490 = vmatprep.subr.mxu0 0.0
  %491 = vmatpush1.msra.mxu0 0.0
  %492 = vmatprep.subr.mxu0 0.0
  %493 = vmatpush1.msra.mxu0 0.0
  %494 = vmatprep.subr.mxu0 0.0
  %495 = vmatpush1.msra.mxu0 0.0
  %496 = vmatprep.subr.mxu0 0.0
  %497 = vmatpush1.msra.mxu0 0.0
  %498 = vmatprep.subr.mxu0 0.0
  %499 = vmatpush1.msra.mxu0 0.0
  %500 = vmatprep.subr.mxu0 0.0
  %501 = vmatpush1.msra.mxu0 0.0
  %502 = vmatprep.subr.mxu0 0.0
  %503 = vmatpush1.msra.mxu0 0.0
  %504 = vmatprep.subr.mxu0 0.0
  %505 = vmatpush1.msra.mxu0 0.0
  %506 = vmatprep.subr.mxu0 0.0
  %507 = vmatpush1.msra.mxu0 0.0
  %508 = vmatprep.subr.mxu0 0.0
  %509 = vmatpush1.msra.mxu0 0.0
  %510 = vmatprep.subr.mxu0 0.0
  %511 = vmatpush1.msra.mxu0 0.0
  %512 = vmatprep.subr.mxu0 0.0
  %513 = vmatpush1.msra.mxu0 0.0
  %514 = vmatprep.subr.mxu0 0.0
  %515 = vmatpush1.msra.mxu0 0.0
  %516 = vmatprep.subr.mxu0 0.0
  %517 = vmatpush1.msra.mxu0 0.0
  %518 = vmatprep.subr.mxu0 0.0
  %519 = vmatpush1.msra.mxu0 0.0
  %520 = vmatprep.subr.mxu0 0.0
  %521 = vmatpush1.msra.mxu0 0.0
  %522 = vmatprep.subr.mxu0 0.0
  %523 = vmatpush1.msra.mxu0 0.0
  %524 = vmatprep.subr.mxu0 0.0
  %525 = vmatpush1.msra.mxu0 0.0
  %526 = vmatprep.subr.mxu0 0.0
  %527 = vmatpush1.msra.mxu0 0.0
  %528 = vmatprep.subr.mxu0 0.0
  %529 = vmatpush1.msra.mxu0 0.0
  %530 = vmatprep.subr.mxu0 0.0
  %531 = vmatpush1.msra.mxu0 0.0
  %532 = vmatprep.subr.mxu0 0.0
  %533 = vmatpush1.msra.mxu0 0.0
  %534 = vmatprep.subr.mxu0 0.0
  %535 = vmatpush1.msra.mxu0 0.0
  %536 = vmatprep.mubr.f32.mxu0 0.0
  %537 = vmatmul.mubr.f32.gmra.mrb[0].mxu0 %v470
  %v538 = vpop.f32.mrb[0].mxu0
  %v539 = vadd.f32 0.0, %v538
  %v540 = vpop.f32.mrb[0].mxu0
  %541 = vdwg.mxu0
  %542 = vst [vmem:[%s5] sm:$0x1] %v539
  %v543 = vld [vmem:[%s3] sm:$0xff]
  %v544 = vld [vmem:[%s3 + $0x8] sm:$0xff]
  %v545 = vld [vmem:[%s3 + $0x10] sm:$0xff]
  %v546 = vld [vmem:[%s3 + $0x18] sm:$0xff]
  %v547 = vld [vmem:[%s3 + $0x20] sm:$0xff]
  %v548 = vld [vmem:[%s3 + $0x28] sm:$0xff]
  %v549 = vld [vmem:[%s3 + $0x30] sm:$0xff]
  %v550 = vld [vmem:[%s3 + $0x38] sm:$0xff]
  %v552 = vsel %vm468, %v543, 0
  %v555 = vsel %vm468, %v544, 0
  %v558 = vsel %vm468, %v545, 0
  %v561 = vsel %vm468, %v546, 0
  %v564 = vsel %vm468, %v547, 0
  %v567 = vsel %vm468, %v548, 0
  %v570 = vsel %vm468, %v549, 0
  %v573 = vsel %vm468, %v550, 0
  %575 = vmatprep.subr.mxu0 0.0
  %576 = vmatpush1.msra.mxu0 %v420
  %577 = vmatprep.subr.mxu0 0.0
  %578 = vmatpush1.msra.mxu0 %v421
  %579 = vmatprep.subr.mxu0 0.0
  %580 = vmatpush1.msra.mxu0 %v422
  %581 = vmatprep.subr.mxu0 0.0
  %582 = vmatpush1.msra.mxu0 %v423
  %583 = vmatprep.subr.mxu0 0.0
  %584 = vmatpush1.msra.mxu0 %v424
  %585 = vmatprep.subr.mxu0 0.0
  %586 = vmatpush1.msra.mxu0 %v425
  %587 = vmatprep.subr.mxu0 0.0
  %588 = vmatpush1.msra.mxu0 %v426
  %589 = vmatprep.subr.mxu0 0.0
  %590 = vmatpush1.msra.mxu0 %v427
  %591 = vmatprep.subr.mxu0 0.0
  %592 = vmatpush1.msra.mxu0 0.0
  %593 = vmatprep.subr.mxu0 0.0
  %594 = vmatpush1.msra.mxu0 0.0
  %595 = vmatprep.subr.mxu0 0.0
  %596 = vmatpush1.msra.mxu0 0.0
  %597 = vmatprep.subr.mxu0 0.0
  %598 = vmatpush1.msra.mxu0 0.0
  %599 = vmatprep.subr.mxu0 0.0
  %600 = vmatpush1.msra.mxu0 0.0
  %601 = vmatprep.subr.mxu0 0.0
  %602 = vmatpush1.msra.mxu0 0.0
  %603 = vmatprep.subr.mxu0 0.0
  %604 = vmatpush1.msra.mxu0 0.0
  %605 = vmatprep.subr.mxu0 0.0
  %606 = vmatpush1.msra.mxu0 0.0
  %607 = vmatprep.subr.mxu0 0.0
  %608 = vmatpush1.msra.mxu0 0.0
  %609 = vmatprep.subr.mxu0 0.0
  %610 = vmatpush1.msra.mxu0 0.0
  %611 = vmatprep.subr.mxu0 0.0
  %612 = vmatpush1.msra.mxu0 0.0
  %613 = vmatprep.subr.mxu0 0.0
  %614 = vmatpush1.msra.mxu0 0.0
  %615 = vmatprep.subr.mxu0 0.0
  %616 = vmatpush1.msra.mxu0 0.0
  %617 = vmatprep.subr.mxu0 0.0
  %618 = vmatpush1.msra.mxu0 0.0
  %619 = vmatprep.subr.mxu0 0.0
  %620 = vmatpush1.msra.mxu0 0.0
  %621 = vmatprep.subr.mxu0 0.0
  %622 = vmatpush1.msra.mxu0 0.0
  %623 = vmatprep.subr.mxu0 0.0
  %624 = vmatpush1.msra.mxu0 0.0
  %625 = vmatprep.subr.mxu0 0.0
  %626 = vmatpush1.msra.mxu0 0.0
  %627 = vmatprep.subr.mxu0 0.0
  %628 = vmatpush1.msra.mxu0 0.0
  %629 = vmatprep.subr.mxu0 0.0
  %630 = vmatpush1.msra.mxu0 0.0
  %631 = vmatprep.subr.mxu0 0.0
  %632 = vmatpush1.msra.mxu0 0.0
  %633 = vmatprep.subr.mxu0 0.0
  %634 = vmatpush1.msra.mxu0 0.0
  %635 = vmatprep.subr.mxu0 0.0
  %636 = vmatpush1.msra.mxu0 0.0
  %637 = vmatprep.subr.mxu0 0.0
  %638 = vmatpush1.msra.mxu0 0.0
  %639 = vmatprep.mubr.f32.mxu0 0.0
  %640 = vmatmul.mubr.f32.gmra.mrb[0].mxu0 %v552
  %v641 = vpop.f32.mrb[0].mxu0
  %v642 = vadd.f32 0.0, %v641
  %v643 = vpop.f32.mrb[0].mxu0
  %644 = vmatprep.mubr.f32.mxu0 0.0
  %645 = vmatmul.mubr.f32.gmra.mrb[0].mxu0 %v555
  %v646 = vpop.f32.mrb[0].mxu0
  %v647 = vadd.f32 0.0, %v646
  %v648 = vpop.f32.mrb[0].mxu0
  %649 = vmatprep.mubr.f32.mxu0 0.0
  %650 = vmatmul.mubr.f32.gmra.mrb[0].mxu0 %v558
  %v651 = vpop.f32.mrb[0].mxu0
  %v652 = vadd.f32 0.0, %v651
  %v653 = vpop.f32.mrb[0].mxu0
  %654 = vmatprep.mubr.f32.mxu0 0.0
  %655 = vmatmul.mubr.f32.gmra.mrb[0].mxu0 %v561
  %v656 = vpop.f32.mrb[0].mxu0
  %v657 = vadd.f32 0.0, %v656
  %v658 = vpop.f32.mrb[0].mxu0
  %659 = vmatprep.mubr.f32.mxu0 0.0
  %660 = vmatmul.mubr.f32.gmra.mrb[0].mxu0 %v564
  %v661 = vpop.f32.mrb[0].mxu0
  %v662 = vadd.f32 0.0, %v661
  %v663 = vpop.f32.mrb[0].mxu0
  %664 = vmatprep.mubr.f32.mxu0 0.0
  %665 = vmatmul.mubr.f32.gmra.mrb[0].mxu0 %v567
  %v666 = vpop.f32.mrb[0].mxu0
  %v667 = vadd.f32 0.0, %v666
  %v668 = vpop.f32.mrb[0].mxu0
  %669 = vmatprep.mubr.f32.mxu0 0.0
  %670 = vmatmul.mubr.f32.gmra.mrb[0].mxu0 %v570
  %v671 = vpop.f32.mrb[0].mxu0
  %v672 = vadd.f32 0.0, %v671
  %v673 = vpop.f32.mrb[0].mxu0
  %674 = vmatprep.mubr.f32.mxu0 0.0
  %675 = vmatmul.mubr.f32.gmra.mrb[0].mxu0 %v573
  %v676 = vpop.f32.mrb[0].mxu0
  %v677 = vadd.f32 0.0, %v676
  %v678 = vpop.f32.mrb[0].mxu0
  %679 = vdwg.mxu0
  %s680 = sadd.f32 %s26, %s27
  %v681 = vmul.f32 %v420, %v642
  %v682 = vmul.f32 %v421, %v647
  %v683 = vmul.f32 %v422, %v652
  %v684 = vmul.f32 %v423, %v657
  %v685 = vmul.f32 %v424, %v662
  %v686 = vmul.f32 %v425, %v667
  %v687 = vmul.f32 %v426, %v672
  %v688 = vmul.f32 %v427, %v677
  %v689 = vadd.f32 %v681, %v682
  %v690 = vadd.f32 %v689, %v683
  %v691 = vadd.f32 %v690, %v684
  %v692 = vadd.f32 %v691, %v685
  %v693 = vadd.f32 %v692, %v686
  %v694 = vadd.f32 %v693, %v687
  %v695 = vadd.f32 %v694, %v688
  %v696 = vrot.slane %v695, 4
  %v697 = vadd.f32 %v695, %v696
  %v698 = vrot.slane %v697, 2
  %v699 = vadd.f32 %v697, %v698
  %v700 = vrot.slane %v699, 1
  %v701 = vadd.f32 %v699, %v700
  %v702 = vstv %s680
  %v703 = vsub.f32 %v702, %v701
  %704 = vst [vmem:[%s6] sm:$0x1] %v703
  // Predicated region
  $region18: #{dilgp_forward.1} parent=0 // pred_check
    _
  $region19: #{dilgp_forward.1} parent=0 // pred_check_branch
    %706 = sbr.rel (0) target = $region21
  $region20: #{dilgp_forward.1} parent=0 // pred_region
    _
  $region21: #{dilgp_forward.1} parent=0 // pred_fallthru
    _
  // Predicated region
  $region22: #{dilgp_forward.1} parent=0 // pred_check
    _
  $region23: #{dilgp_forward.1} parent=0 // pred_check_branch
    %708 = sbr.rel (0) target = $region25
  $region24: #{dilgp_forward.1} parent=0 // pred_region
    _
  $region25: #{dilgp_forward.1} parent=0 // pred_fallthru
    _
  // Predicated region
  $region26: #{dilgp_forward.1} parent=0 // pred_check
    _
  $region27: #{dilgp_forward.1} parent=0 // pred_check_branch
    %710 = sbr.rel (0) target = $region29
  $region28: #{dilgp_forward.1} parent=0 // pred_region
    _
  $region29: #{dilgp_forward.1} parent=0 // pred_fallthru
    _
  // Predicated region
  $region30: #{dilgp_forward.1} parent=0 // pred_check
    _
  $region31: #{dilgp_forward.1} parent=0 // pred_check_branch
    %712 = sbr.rel (0) target = $region33
  $region32: #{dilgp_forward.1} parent=0 // pred_region
    _
  $region33: #{dilgp_forward.1} parent=0 // pred_fallthru
    _

</llo_original>
